<compile_context>
chip_gen: v6e
topology: v6e:2x2x1
jax: 0.10.0
libtpu: 0.0.40
codegen_flags: <defaults>
</compile_context>

<pallas_src>
import jax
import jax.numpy as jnp
from jax.experimental import pallas as pl
from jax.experimental.pallas import tpu as pltpu


def _round_up(n: int, m: int) -> int:
    return ((n + m - 1) // m) * m


def _cdiv(a: int, b: int) -> int:
    return (a + b - 1) // b


# ---------------------------------------------------------------------------
# Kernel: x -> tanh(x@W1+b1) -> tanh(.@W2+b2) -> .@W_pv + b_pv   (fused tails)
# ---------------------------------------------------------------------------
def hexbot_kernel(x_ref, w1_ref, b1_ref, w2_ref, b2_ref, wpv_ref, bpv_ref,
                  out_ref):
    # Layer 1 + tanh: MXU matmul with f32 accumulation, bias/tanh in f32 (EUP).
    h1 = jnp.tanh(
        jnp.dot(x_ref[...], w1_ref[...], preferred_element_type=jnp.float32)
        + b1_ref[...]
    )
    # Layer 2 + tanh.
    h2 = jnp.tanh(
        jnp.dot(h1.astype(w2_ref.dtype), w2_ref[...],
                preferred_element_type=jnp.float32)
        + b2_ref[...]
    )
    # Fused policy+value tail: single matmul, true A+1 output columns.
    out_ref[...] = (
        jnp.dot(h2.astype(wpv_ref.dtype), wpv_ref[...],
                preferred_element_type=jnp.float32)
        + bpv_ref[...]
    ).astype(out_ref.dtype)


# ---------------------------------------------------------------------------
# Parameter packing: fuse tails; pad ONLY the hidden dims to 128 lanes.
# ---------------------------------------------------------------------------
def pack_params(params, compute_dtype=jnp.bfloat16):
    w1, b1, w2, b2 = params["w1"], params["b1"], params["w2"], params["b2"]
    wp, bp, wv, bv = params["wp"], params["bp"], params["wv"], params["bv"]

    d_in, h1 = w1.shape
    h2 = w2.shape[1]
    nr_actions = wp.shape[1]

    d_in_p = _round_up(d_in, 8)        # HBM-facing: keep tight (sublane mult)
    h1_p = _round_up(h1, 128)          # MXU-internal: lane-dense, free in HBM terms
    h2_p = _round_up(h2, 128)
    out_dim = nr_actions + 1           # policy logits + 1 value column, unpadded

    def pad2(a, rows, cols):
        return jnp.pad(a, ((0, rows - a.shape[0]), (0, cols - a.shape[1])))

    wpv = jnp.concatenate([wp, wv], axis=1)
    bpv = jnp.concatenate([bp, bv], axis=1)

    packed = dict(
        w1=pad2(w1, d_in_p, h1_p).astype(compute_dtype),
        b1=pad2(b1, 1, h1_p).astype(jnp.float32),
        w2=pad2(w2, h1_p, h2_p).astype(compute_dtype),
        b2=pad2(b2, 1, h2_p).astype(jnp.float32),
        wpv=pad2(wpv, h2_p, out_dim).astype(compute_dtype),
        bpv=bpv.astype(jnp.float32),
    )
    meta = dict(d_in=d_in, d_in_p=d_in_p, h1=h1, h2=h2, h1_p=h1_p, h2_p=h2_p,
                nr_actions=nr_actions, out_dim=out_dim,
                compute_dtype=compute_dtype)
    return packed, meta


# ---------------------------------------------------------------------------
# Batch tiling: big tiles, but keep >= 4 grid steps for large batches so the
# DMA/compute pipeline overlaps and the parallel axis shards across v7x's TCs.
# ---------------------------------------------------------------------------
def _choose_batch_tiling(B, max_tile_b):
    steps = max(1, _cdiv(B, max_tile_b))
    if B >= 128:
        steps = max(steps, 4)
    tile_b = _round_up(_cdiv(B, steps), 8)
    b_p = steps * tile_b
    return tile_b, b_p, steps


# ---------------------------------------------------------------------------
# Forward wrapper
# ---------------------------------------------------------------------------
def hexbot_forward(x, packed, meta, *, max_tile_b=4096):
    """x: (B, D_in) float32. Returns (pi (B, A), v (B, 1)) in float32."""
    B, d_in = x.shape
    assert d_in == meta["d_in"]
    d_in_p, out_dim = meta["d_in_p"], meta["out_dim"]
    nr_actions = meta["nr_actions"]
    compute_dtype = meta["compute_dtype"]

    tile_b, b_p, steps = _choose_batch_tiling(B, max_tile_b)

    x_p = jnp.pad(x, ((0, b_p - B), (0, d_in_p - d_in))).astype(compute_dtype)

    w1, b1 = packed["w1"], packed["b1"]
    w2, b2 = packed["w2"], packed["b2"]
    wpv, bpv = packed["wpv"], packed["bpv"]

    batch_map = lambda i: (i, 0)     # x / out tiles walk the batch
    weight_map = lambda i: (0, 0)    # weights stay resident across the grid

    # Cost estimate from the TRUE (unpadded) dims — advisory only.
    in_itemsize = jnp.dtype(compute_dtype).itemsize
    flops = 2 * B * (d_in * meta["h1"]
                     + meta["h1"] * meta["h2"]
                     + meta["h2"] * out_dim)
    transcendentals = B * (meta["h1"] + meta["h2"])
    bytes_accessed = (
        B * d_in * in_itemsize
        + sum(int(a.size) * jnp.dtype(a.dtype).itemsize
              for a in (w1, b1, w2, b2, wpv, bpv))
        + B * out_dim * 4
    )

    out = pl.pallas_call(
        hexbot_kernel,
        out_shape=jax.ShapeDtypeStruct((b_p, out_dim), jnp.float32),
        grid=(steps,),
        in_specs=[
            pl.BlockSpec((tile_b, d_in_p), batch_map),   # last dim == full array dim
            pl.BlockSpec(w1.shape, weight_map),
            pl.BlockSpec(b1.shape, weight_map),
            pl.BlockSpec(w2.shape, weight_map),
            pl.BlockSpec(b2.shape, weight_map),
            pl.BlockSpec(wpv.shape, weight_map),
            pl.BlockSpec(bpv.shape, weight_map),
        ],
        out_specs=pl.BlockSpec((tile_b, out_dim), batch_map),  # true A+1 lanes
        compiler_params=pltpu.CompilerParams(
            dimension_semantics=("parallel",)),
        cost_estimate=pl.CostEstimate(
            flops=flops,
            transcendentals=transcendentals,
            bytes_accessed=bytes_accessed),
    )(x_p, w1, b1, w2, b2, wpv, bpv)

    pi = out[:B, :nr_actions]
    v = out[:B, nr_actions:nr_actions + 1]
    return pi, v


# ---------------------------------------------------------------------------
# Synthetic parameter init (shapes match HexBot.__init__) and JAX reference.
# ---------------------------------------------------------------------------
def init_params(key, game_size, inner_neurons_1=64, inner_neurons_2=64):
    inputs = game_size * game_size * 2
    nr_actions = game_size * game_size
    ks = jax.random.split(key, 8)

    def lin(kw, kb, fan_in, fan_out):
        # torch.nn.Linear default: U(-1/sqrt(fan_in), 1/sqrt(fan_in))
        bound = 1.0 / jnp.sqrt(jnp.float32(fan_in))
        w = jax.random.uniform(kw, (fan_in, fan_out), jnp.float32, -bound, bound)
        b = jax.random.uniform(kb, (1, fan_out), jnp.float32, -bound, bound)
        return w, b

    w1, b1 = lin(ks[0], ks[1], inputs, inner_neurons_1)
    w2, b2 = lin(ks[2], ks[3], inner_neurons_1, inner_neurons_2)
    wp, bp = lin(ks[4], ks[5], inner_neurons_2, nr_actions)
    wv, bv = lin(ks[6], ks[7], inner_neurons_2, 1)
    return dict(w1=w1, b1=b1, w2=w2, b2=b2, wp=wp, bp=bp, wv=wv, bv=bv)


def hexbot_reference(x, p):
    h1 = jnp.tanh(x @ p["w1"] + p["b1"])
    h2 = jnp.tanh(h1 @ p["w2"] + p["b2"])
    return h2 @ p["wp"] + p["bp"], h2 @ p["wv"] + p["bv"]


# TODO(synk): play_policy (masked Categorical sampling) is host-side game
# logic outside the nn.Module forward and is not translated to Pallas.

if __name__ == "__main__":
    game_size = 4          # small board -> D_in = 32, nr_actions = 16
    batch = 2
    key = jax.random.PRNGKey(0)
    kx, kp = jax.random.split(key)

    params = init_params(kp, game_size)

    # One-hot-ish board encoding (random 0/1 floats for the synthetic test).
    x = jax.random.bernoulli(
        kx, p=0.3, shape=(batch, game_size * game_size * 2)
    ).astype(jnp.float32)

    pi_ref, v_ref = hexbot_reference(x, params)

    # f32 path: matches the pure-JAX reference to tight tolerance.
    packed32, meta32 = pack_params(params, compute_dtype=jnp.float32)
    pi, v = hexbot_forward(x, packed32, meta32)
    jax.block_until_ready((pi, v))
    assert pi.shape == (batch, game_size * game_size)
    assert v.shape == (batch, 1)
    assert jnp.allclose(pi, pi_ref, atol=1e-5, rtol=1e-5)
    assert jnp.allclose(v, v_ref, atol=1e-5, rtol=1e-5)

    # bf16 fast path (default for self-play batches on v5e/v6e/v7x): halves
    # the dominant HBM streams; f32 accumulate + f32 bias/tanh keep accuracy.
    packedbf, metabf = pack_params(params, compute_dtype=jnp.bfloat16)
    pib, vb = hexbot_forward(x, packedbf, metabf)
    jax.block_until_ready((pib, vb))
    assert jnp.allclose(pib, pi_ref, atol=5e-2, rtol=5e-2)
    assert jnp.allclose(vb, v_ref, atol=5e-2, rtol=5e-2)

    print("KERNEL_OK")
</pallas_src>

<mosaic_0001>
module attributes {stable_mosaic.version = 11 : i64} {
  func.func @hexbot_kernel(%arg0: i32, %arg1: memref<8x32xf32, #tpu.memory_space<vmem>>, %arg2: memref<32x128xf32, #tpu.memory_space<vmem>>, %arg3: memref<1x128xf32, #tpu.memory_space<vmem>>, %arg4: memref<128x128xf32, #tpu.memory_space<vmem>>, %arg5: memref<1x128xf32, #tpu.memory_space<vmem>>, %arg6: memref<128x17xf32, #tpu.memory_space<vmem>>, %arg7: memref<1x17xf32, #tpu.memory_space<vmem>>, %arg8: memref<8x17xf32, #tpu.memory_space<vmem>>) attributes {dimension_semantics = [#tpu.dimension_semantics<parallel>], iteration_bounds = array<i64: 1>, scalar_prefetch = 0 : i64, scratch_operands = 0 : i64, tpu.core_type = #tpu.core_type<tc>, window_params = [{transform_indices = @transform_0, window_bounds = array<i64: 8, 32>}, {pipeline_mode = #tpu.pipeline_mode<synchronous>, transform_indices = @transform_1, window_bounds = array<i64: 32, 128>}, {pipeline_mode = #tpu.pipeline_mode<synchronous>, transform_indices = @transform_2, window_bounds = array<i64: 1, 128>}, {pipeline_mode = #tpu.pipeline_mode<synchronous>, transform_indices = @transform_3, window_bounds = array<i64: 128, 128>}, {pipeline_mode = #tpu.pipeline_mode<synchronous>, transform_indices = @transform_4, window_bounds = array<i64: 1, 128>}, {pipeline_mode = #tpu.pipeline_mode<synchronous>, transform_indices = @transform_5, window_bounds = array<i64: 128, 17>}, {pipeline_mode = #tpu.pipeline_mode<synchronous>, transform_indices = @transform_6, window_bounds = array<i64: 1, 17>}, {transform_indices = @transform_7, window_bounds = array<i64: 8, 17>}]} {
    %c0 = arith.constant 0 : index
    %c0_0 = arith.constant 0 : index
    %0 = vector.load %arg1[%c0, %c0_0] : memref<8x32xf32, #tpu.memory_space<vmem>>, vector<8x32xf32>
    %c0_1 = arith.constant 0 : index
    %c0_2 = arith.constant 0 : index
    %1 = vector.load %arg2[%c0_1, %c0_2] : memref<32x128xf32, #tpu.memory_space<vmem>>, vector<32x128xf32>
    %cst = arith.constant dense<0.000000e+00> : vector<8x128xf32>
    %2 = tpu.matmul %0, %1, %cst {dimension_numbers = #tpu.dot_dimension_numbers<[1], [0], [0], [1], [0, 0, 1, 1], [], []>} : vector<8x32xf32>, vector<32x128xf32>, vector<8x128xf32> -> vector<8x128xf32>
    %c0_3 = arith.constant 0 : index
    %c0_4 = arith.constant 0 : index
    %3 = vector.load %arg3[%c0_3, %c0_4] : memref<1x128xf32, #tpu.memory_space<vmem>>, vector<1x128xf32>
    %4 = vector.broadcast %3 : vector<1x128xf32> to vector<8x128xf32>
    %5 = arith.addf %2, %4 : vector<8x128xf32>
    %6 = math.tanh %5 : vector<8x128xf32>
    %c0_5 = arith.constant 0 : index
    %c0_6 = arith.constant 0 : index
    %7 = vector.load %arg4[%c0_5, %c0_6] : memref<128x128xf32, #tpu.memory_space<vmem>>, vector<128x128xf32>
    %cst_7 = arith.constant dense<0.000000e+00> : vector<8x128xf32>
    %8 = tpu.matmul %6, %7, %cst_7 {dimension_numbers = #tpu.dot_dimension_numbers<[1], [0], [0], [1], [0, 0, 1, 1], [], []>} : vector<8x128xf32>, vector<128x128xf32>, vector<8x128xf32> -> vector<8x128xf32>
    %c0_8 = arith.constant 0 : index
    %c0_9 = arith.constant 0 : index
    %9 = vector.load %arg5[%c0_8, %c0_9] : memref<1x128xf32, #tpu.memory_space<vmem>>, vector<1x128xf32>
    %10 = vector.broadcast %9 : vector<1x128xf32> to vector<8x128xf32>
    %11 = arith.addf %8, %10 : vector<8x128xf32>
    %12 = math.tanh %11 : vector<8x128xf32>
    %c0_10 = arith.constant 0 : index
    %c0_11 = arith.constant 0 : index
    %13 = vector.load %arg6[%c0_10, %c0_11] : memref<128x17xf32, #tpu.memory_space<vmem>>, vector<128x17xf32>
    %cst_12 = arith.constant dense<0.000000e+00> : vector<8x17xf32>
    %14 = tpu.matmul %12, %13, %cst_12 {dimension_numbers = #tpu.dot_dimension_numbers<[1], [0], [0], [1], [0, 0, 1, 1], [], []>} : vector<8x128xf32>, vector<128x17xf32>, vector<8x17xf32> -> vector<8x17xf32>
    %c0_13 = arith.constant 0 : index
    %c0_14 = arith.constant 0 : index
    %15 = vector.load %arg7[%c0_13, %c0_14] : memref<1x17xf32, #tpu.memory_space<vmem>>, vector<1x17xf32>
    %16 = vector.broadcast %15 : vector<1x17xf32> to vector<8x17xf32>
    %17 = arith.addf %14, %16 : vector<8x17xf32>
    %c0_15 = arith.constant 0 : index
    %c0_16 = arith.constant 0 : index
    %18 = vector.load %arg8[%c0_15, %c0_16] : memref<8x17xf32, #tpu.memory_space<vmem>>, vector<8x17xf32>
    tpu.vector_store %arg8[%c0_15, %c0_16], %17 {strides = array<i32>} : memref<8x17xf32, #tpu.memory_space<vmem>>, vector<8x17xf32>,
    return
  }
  func.func @transform_0(%arg0: i32) -> (i32, i32) {
    %c0_i32 = arith.constant 0 : i32
    %c0_i32_0 = arith.constant 0 : i32
    return %arg0, %c0_i32 : i32, i32
  }
  func.func @transform_1(%arg0: i32) -> (i32, i32) {
    %c0_i32 = arith.constant 0 : i32
    %c0_i32_0 = arith.constant 0 : i32
    %c0_i32_1 = arith.constant 0 : i32
    return %c0_i32, %c0_i32_0 : i32, i32
  }
  func.func @transform_2(%arg0: i32) -> (i32, i32) {
    %c0_i32 = arith.constant 0 : i32
    %c0_i32_0 = arith.constant 0 : i32
    %c0_i32_1 = arith.constant 0 : i32
    return %c0_i32, %c0_i32_0 : i32, i32
  }
  func.func @transform_3(%arg0: i32) -> (i32, i32) {
    %c0_i32 = arith.constant 0 : i32
    %c0_i32_0 = arith.constant 0 : i32
    %c0_i32_1 = arith.constant 0 : i32
    return %c0_i32, %c0_i32_0 : i32, i32
  }
  func.func @transform_4(%arg0: i32) -> (i32, i32) {
    %c0_i32 = arith.constant 0 : i32
    %c0_i32_0 = arith.constant 0 : i32
    %c0_i32_1 = arith.constant 0 : i32
    return %c0_i32, %c0_i32_0 : i32, i32
  }
  func.func @transform_5(%arg0: i32) -> (i32, i32) {
    %c0_i32 = arith.constant 0 : i32
    %c0_i32_0 = arith.constant 0 : i32
    %c0_i32_1 = arith.constant 0 : i32
    return %c0_i32, %c0_i32_0 : i32, i32
  }
  func.func @transform_6(%arg0: i32) -> (i32, i32) {
    %c0_i32 = arith.constant 0 : i32
    %c0_i32_0 = arith.constant 0 : i32
    %c0_i32_1 = arith.constant 0 : i32
    return %c0_i32, %c0_i32_0 : i32, i32
  }
  func.func @transform_7(%arg0: i32) -> (i32, i32) {
    %c0_i32 = arith.constant 0 : i32
    %c0_i32_0 = arith.constant 0 : i32
    return %arg0, %c0_i32 : i32, i32
  }
}

</mosaic_0001>

<llo_original>
// kernel: tpu_custom_call.1
$region0: #{tpu_custom_call.1}
  #allocation0 [shape = 'u32[]', space=smem, size = 0x4, offset = 0x4, fixed_abs, tag = 'smem constant byte address 0x4 - core index']
  #allocation1 [shape = 'u32[144,128]{1,0:T(1,128)}', space=vmem, size = 0x12000, scoped, tag = 'internal scratch']
  %s0 = inlined_call_operand.vmem [shape: f32[8,32], index: 0, kind: input, shape index: {}]
  %s1 = inlined_call_operand.hbm [shape: f32[32,128], index: 1, kind: input, shape index: {}]
  %s2 = inlined_call_operand.vmem [shape: f32[1,128], index: 2, kind: input, shape index: {}]
  %s3 = inlined_call_operand.vmem [shape: f32[128,128], index: 3, kind: input, shape index: {}]
  %s4 = inlined_call_operand.vmem [shape: f32[1,128], index: 4, kind: input, shape index: {}]
  %s5 = inlined_call_operand.vmem [shape: f32[128,17], index: 5, kind: input, shape index: {}]
  %s6 = inlined_call_operand.vmem [shape: f32[1,17], index: 6, kind: input, shape index: {}]
  %s7 = inlined_call_operand.hbm [shape: f32[8,17], index: 7, kind: output, shape index: {}]
  %s8 = sld [smem:[#allocation0]]
  $region42: #{tpu_custom_call.1} parent=0
    _
  %s10 = ssub.s32 1, %s8
  %s11 = scalar_select 0, %s10, %s8
  $region1: #{tpu_custom_call.1} parent=0
    #allocation2 [shape = 'u8[16384]{0}', space=vmem, size = 0x4000, scoped, tag = 'input window, operand 1, single buffered']
    #allocation3 [shape = 's32[1]{0}', space=sflag, size = 0x4, scoped, tag = 'scoped memory for tpu_custom_call.1']
    #allocation4 [shape = 's32[1]{0}', space=sflag, size = 0x4, scoped, tag = 'scoped memory for tpu_custom_call.1']
    #allocation5 [shape = 'u8[4096]{0}', space=vmem, size = 0x1000, scoped, tag = 'output window, operand 0, single buffered']
    %12 = vsyncpa [#allocation3], 0
    %13 = vsyncpa [#allocation4], 0
    // Predicated region
    $region2: #{tpu_custom_call.1} parent=1 // pred_check
      _
    $region3: #{tpu_custom_call.1} parent=1 // pred_check_branch
      %15 = sbr.rel (0) target = $region5
    $region4: #{tpu_custom_call.1} parent=1 // pred_region
      _
    $region5: #{tpu_custom_call.1} parent=1 // pred_fallthru
      _
    // Predicated region
    $region6: #{tpu_custom_call.1} parent=1 // pred_check
      _
    $region7: #{tpu_custom_call.1} parent=1 // pred_check_branch
      %17 = sbr.rel (0) target = $region9
    $region8: #{tpu_custom_call.1} parent=1 // pred_region
      %s19 = ssub.s32 512, 512
      %20 = vsyncadd [#allocation3], %s19
      %s21 = sshll.u32 [#allocation2], 4
      %s22 = int_to_ptr.vmem [resolvable:$true] %s21
      %27 = dma.hbm_to_vmem [thread:$0]  %s1, 512, %s22, [#allocation3], 128, 128, 8
    $region9: #{tpu_custom_call.1} parent=1 // pred_fallthru
      _
    // Predicated region
    $region10: #{tpu_custom_call.1} parent=1 // pred_check
      _
    $region11: #{tpu_custom_call.1} parent=1 // pred_check_branch
      %29 = sbr.rel (0) target = $region13
    $region12: #{tpu_custom_call.1} parent=1 // pred_region
      _
    $region13: #{tpu_custom_call.1} parent=1 // pred_fallthru
      _
    // Predicated region
    $region14: #{tpu_custom_call.1} parent=1 // pred_check
      _
    $region15: #{tpu_custom_call.1} parent=1 // pred_check_branch
      %31 = sbr.rel (0) target = $region17
    $region16: #{tpu_custom_call.1} parent=1 // pred_region
      _
    $region17: #{tpu_custom_call.1} parent=1 // pred_fallthru
      _
    // Predicated region
    $region18: #{tpu_custom_call.1} parent=1 // pred_check
      _
    $region19: #{tpu_custom_call.1} parent=1 // pred_check_branch
      %33 = sbr.rel (0) target = $region21
    $region20: #{tpu_custom_call.1} parent=1 // pred_region
      _
    $region21: #{tpu_custom_call.1} parent=1 // pred_fallthru
      _
    // Predicated region
    $region22: #{tpu_custom_call.1} parent=1 // pred_check
      _
    $region23: #{tpu_custom_call.1} parent=1 // pred_check_branch
      %35 = sbr.rel (0) target = $region25
    $region24: #{tpu_custom_call.1} parent=1 // pred_region
      _
    $region25: #{tpu_custom_call.1} parent=1 // pred_fallthru
      _
    // Predicated region
    $region26: #{tpu_custom_call.1} parent=1 // pred_check
      _
    $region27: #{tpu_custom_call.1} parent=1 // pred_check_branch
      %37 = sbr.rel (0) target = $region29
    $region28: #{tpu_custom_call.1} parent=1 // pred_region
      _
    $region29: #{tpu_custom_call.1} parent=1 // pred_fallthru
      _
    // Predicated region
    $region30: #{tpu_custom_call.1} parent=1 // pred_check
      _
    $region31: #{tpu_custom_call.1} parent=1 // pred_check_branch
      %39 = sbr.rel (0) target = $region33
    $region32: #{tpu_custom_call.1} parent=1 // pred_region
      %40 = dma.done [#allocation3], 512
    $region33: #{tpu_custom_call.1} parent=1 // pred_fallthru
      _
    %v41 = vld [vmem:[%s0] sm:$0xff]
    %v42 = vld [vmem:[#allocation2] sm:$0xff]
    %v43 = vld [vmem:[#allocation2 + $0x8] sm:$0xff]
    %v44 = vld [vmem:[#allocation2 + $0x10] sm:$0xff]
    %v45 = vld [vmem:[#allocation2 + $0x18] sm:$0xff]
    %v46 = vld [vmem:[%s2] sm:$0x1]
    %v48 = vlaneseq
    %v49 = vshrl.u32 %v48, 7
    %v50 = vsub.s32 0, %v49
    %v51 = vrot.slane %v46, %v50
    %vm53 = vcmask 261120
    %v55 = vsel %vm53, %v41, 0
    %57 = vmatprep.subr.mxu0 0.0
    %58 = vmatpush1.msra.mxu0 0.0
    %59 = vmatprep.subr.mxu0 0.0
    %60 = vmatpush1.msra.mxu0 0.0
    %61 = vmatprep.subr.mxu0 0.0
    %62 = vmatpush1.msra.mxu0 0.0
    %63 = vmatprep.subr.mxu0 0.0
    %64 = vmatpush1.msra.mxu0 0.0
    %65 = vmatprep.subr.mxu0 0.0
    %66 = vmatpush1.msra.mxu0 0.0
    %67 = vmatprep.subr.mxu0 0.0
    %68 = vmatpush1.msra.mxu0 0.0
    %69 = vmatprep.subr.mxu0 0.0
    %70 = vmatpush1.msra.mxu0 0.0
    %71 = vmatprep.subr.mxu0 0.0
    %72 = vmatpush1.msra.mxu0 0.0
    %73 = vmatprep.subr.mxu0 0.0
    %74 = vmatpush1.msra.mxu0 0.0
    %75 = vmatprep.subr.mxu0 0.0
    %76 = vmatpush1.msra.mxu0 0.0
    %77 = vmatprep.subr.mxu0 0.0
    %78 = vmatpush1.msra.mxu0 0.0
    %79 = vmatprep.subr.mxu0 0.0
    %80 = vmatpush1.msra.mxu0 0.0
    %81 = vmatprep.subr.mxu0 0.0
    %82 = vmatpush1.msra.mxu0 %v45
    %83 = vmatprep.subr.mxu0 0.0
    %84 = vmatpush1.msra.mxu0 %v44
    %85 = vmatprep.subr.mxu0 0.0
    %86 = vmatpush1.msra.mxu0 %v43
    %87 = vmatprep.subr.mxu0 0.0
    %88 = vmatpush1.msra.mxu0 %v42
    %89 = vmatprep.subr.mxu0 0.0
    %90 = vmatpush2.msra.mxu0 0.0
    %91 = vmatprep.subr.mxu0 0.0
    %92 = vmatpush2.msra.mxu0 0.0
    %93 = vmatprep.subr.mxu0 0.0
    %94 = vmatpush2.msra.mxu0 0.0
    %95 = vmatprep.subr.mxu0 0.0
    %96 = vmatpush2.msra.mxu0 0.0
    %97 = vmatprep.subr.mxu0 0.0
    %98 = vmatpush2.msra.mxu0 0.0
    %99 = vmatprep.subr.mxu0 0.0
    %100 = vmatpush2.msra.mxu0 0.0
    %101 = vmatprep.subr.mxu0 0.0
    %102 = vmatpush2.msra.mxu0 0.0
    %103 = vmatprep.subr.mxu0 0.0
    %104 = vmatpush2.msra.mxu0 0.0
    %105 = vmatprep.subr.mxu0 0.0
    %106 = vmatpush2.msra.mxu0 0.0
    %107 = vmatprep.subr.mxu0 0.0
    %108 = vmatpush2.msra.mxu0 0.0
    %109 = vmatprep.subr.mxu0 0.0
    %110 = vmatpush2.msra.mxu0 0.0
    %111 = vmatprep.subr.mxu0 0.0
    %112 = vmatpush2.msra.mxu0 0.0
    %113 = vmatprep.subr.mxu0 0.0
    %114 = vmatpush2.msra.mxu0 0.0
    %115 = vmatprep.subr.mxu0 0.0
    %116 = vmatpush2.msra.mxu0 0.0
    %117 = vmatprep.subr.mxu0 0.0
    %118 = vmatpush2.msra.mxu0 0.0
    %119 = vmatprep.subr.mxu0 0.0
    %120 = vmatpush2.msra.mxu0 0.0
    %121 = vmatprep.mubr.f32.mxu0 0.0
    %122 = vmatmul.mubr.f32.gmra.mxu0 %v55
    %v123 = vpop.f32.mrf.mxu0
    %v124 = vadd.f32 %v51, %v123
    %v125 = vpop.f32.mrf.mxu0
    %126 = vdwg.mxu0
    %v127 = vtanh.pop %v124
    %v128 = vld [vmem:[%s3] sm:$0xff]
    %v129 = vld [vmem:[%s3 + $0x8] sm:$0xff]
    %v130 = vld [vmem:[%s3 + $0x10] sm:$0xff]
    %v131 = vld [vmem:[%s3 + $0x18] sm:$0xff]
    %v132 = vld [vmem:[%s3 + $0x20] sm:$0xff]
    %v133 = vld [vmem:[%s3 + $0x28] sm:$0xff]
    %v134 = vld [vmem:[%s3 + $0x30] sm:$0xff]
    %v135 = vld [vmem:[%s3 + $0x38] sm:$0xff]
    %v136 = vld [vmem:[%s3 + $0x40] sm:$0xff]
    %v137 = vld [vmem:[%s3 + $0x48] sm:$0xff]
    %v138 = vld [vmem:[%s3 + $0x50] sm:$0xff]
    %v139 = vld [vmem:[%s3 + $0x58] sm:$0xff]
    %v140 = vld [vmem:[%s3 + $0x60] sm:$0xff]
    %v141 = vld [vmem:[%s3 + $0x68] sm:$0xff]
    %v142 = vld [vmem:[%s3 + $0x70] sm:$0xff]
    %v143 = vld [vmem:[%s3 + $0x78] sm:$0xff]
    %v144 = vld [vmem:[%s4] sm:$0x1]
    %v146 = vlaneseq
    %v147 = vshrl.u32 %v146, 7
    %v148 = vsub.s32 0, %v147
    %v149 = vrot.slane %v144, %v148
    %151 = vmatprep.subr.mxu0 0.0
    %152 = vmatpush1.msra.mxu0 %v143
    %153 = vmatprep.subr.mxu0 0.0
    %154 = vmatpush1.msra.mxu0 %v142
    %155 = vmatprep.subr.mxu0 0.0
    %156 = vmatpush1.msra.mxu0 %v141
    %157 = vmatprep.subr.mxu0 0.0
    %158 = vmatpush1.msra.mxu0 %v140
    %159 = vmatprep.subr.mxu0 0.0
    %160 = vmatpush1.msra.mxu0 %v139
    %161 = vmatprep.subr.mxu0 0.0
    %162 = vmatpush1.msra.mxu0 %v138
    %163 = vmatprep.subr.mxu0 0.0
    %164 = vmatpush1.msra.mxu0 %v137
    %165 = vmatprep.subr.mxu0 0.0
    %166 = vmatpush1.msra.mxu0 %v136
    %167 = vmatprep.subr.mxu0 0.0
    %168 = vmatpush1.msra.mxu0 %v135
    %169 = vmatprep.subr.mxu0 0.0
    %170 = vmatpush1.msra.mxu0 %v134
    %171 = vmatprep.subr.mxu0 0.0
    %172 = vmatpush1.msra.mxu0 %v133
    %173 = vmatprep.subr.mxu0 0.0
    %174 = vmatpush1.msra.mxu0 %v132
    %175 = vmatprep.subr.mxu0 0.0
    %176 = vmatpush1.msra.mxu0 %v131
    %177 = vmatprep.subr.mxu0 0.0
    %178 = vmatpush1.msra.mxu0 %v130
    %179 = vmatprep.subr.mxu0 0.0
    %180 = vmatpush1.msra.mxu0 %v129
    %181 = vmatprep.subr.mxu0 0.0
    %182 = vmatpush1.msra.mxu0 %v128
    %183 = vmatprep.subr.mxu0 0.0
    %184 = vmatpush2.msra.mxu0 0.0
    %185 = vmatprep.subr.mxu0 0.0
    %186 = vmatpush2.msra.mxu0 0.0
    %187 = vmatprep.subr.mxu0 0.0
    %188 = vmatpush2.msra.mxu0 0.0
    %189 = vmatprep.subr.mxu0 0.0
    %190 = vmatpush2.msra.mxu0 0.0
    %191 = vmatprep.subr.mxu0 0.0
    %192 = vmatpush2.msra.mxu0 0.0
    %193 = vmatprep.subr.mxu0 0.0
    %194 = vmatpush2.msra.mxu0 0.0
    %195 = vmatprep.subr.mxu0 0.0
    %196 = vmatpush2.msra.mxu0 0.0
    %197 = vmatprep.subr.mxu0 0.0
    %198 = vmatpush2.msra.mxu0 0.0
    %199 = vmatprep.subr.mxu0 0.0
    %200 = vmatpush2.msra.mxu0 0.0
    %201 = vmatprep.subr.mxu0 0.0
    %202 = vmatpush2.msra.mxu0 0.0
    %203 = vmatprep.subr.mxu0 0.0
    %204 = vmatpush2.msra.mxu0 0.0
    %205 = vmatprep.subr.mxu0 0.0
    %206 = vmatpush2.msra.mxu0 0.0
    %207 = vmatprep.subr.mxu0 0.0
    %208 = vmatpush2.msra.mxu0 0.0
    %209 = vmatprep.subr.mxu0 0.0
    %210 = vmatpush2.msra.mxu0 0.0
    %211 = vmatprep.subr.mxu0 0.0
    %212 = vmatpush2.msra.mxu0 0.0
    %213 = vmatprep.subr.mxu0 0.0
    %214 = vmatpush2.msra.mxu0 0.0
    %215 = vmatprep.mubr.f32.mxu0 0.0
    %216 = vmatmul.mubr.f32.gmra.mxu0 %v127
    %v217 = vpop.f32.mrf.mxu0
    %v218 = vadd.f32 %v149, %v217
    %v219 = vpop.f32.mrf.mxu0
    %220 = vdwg.mxu0
    %v221 = vtanh.pop %v218
    %v222 = vld [vmem:[%s5] sm:$0xff]
    %v223 = vld [vmem:[%s5 + $0x8] sm:$0xff]
    %v224 = vld [vmem:[%s5 + $0x10] sm:$0xff]
    %v225 = vld [vmem:[%s5 + $0x18] sm:$0xff]
    %v226 = vld [vmem:[%s5 + $0x20] sm:$0xff]
    %v227 = vld [vmem:[%s5 + $0x28] sm:$0xff]
    %v228 = vld [vmem:[%s5 + $0x30] sm:$0xff]
    %v229 = vld [vmem:[%s5 + $0x38] sm:$0xff]
    %v230 = vld [vmem:[%s5 + $0x40] sm:$0xff]
    %v231 = vld [vmem:[%s5 + $0x48] sm:$0xff]
    %v232 = vld [vmem:[%s5 + $0x50] sm:$0xff]
    %v233 = vld [vmem:[%s5 + $0x58] sm:$0xff]
    %v234 = vld [vmem:[%s5 + $0x60] sm:$0xff]
    %v235 = vld [vmem:[%s5 + $0x68] sm:$0xff]
    %v236 = vld [vmem:[%s5 + $0x70] sm:$0xff]
    %v237 = vld [vmem:[%s5 + $0x78] sm:$0xff]
    %v238 = vld [vmem:[%s6] sm:$0x1]
    %v240 = vlaneseq
    %v241 = vshrl.u32 %v240, 7
    %v242 = vsub.s32 0, %v241
    %v243 = vrot.slane %v238, %v242
    %245 = vmatprep.subr.mxu0 0.0
    %246 = vmatpush1.msra.mxu0 %v237
    %247 = vmatprep.subr.mxu0 0.0
    %248 = vmatpush1.msra.mxu0 %v236
    %249 = vmatprep.subr.mxu0 0.0
    %250 = vmatpush1.msra.mxu0 %v235
    %251 = vmatprep.subr.mxu0 0.0
    %252 = vmatpush1.msra.mxu0 %v234
    %253 = vmatprep.subr.mxu0 0.0
    %254 = vmatpush1.msra.mxu0 %v233
    %255 = vmatprep.subr.mxu0 0.0
    %256 = vmatpush1.msra.mxu0 %v232
    %257 = vmatprep.subr.mxu0 0.0
    %258 = vmatpush1.msra.mxu0 %v231
    %259 = vmatprep.subr.mxu0 0.0
    %260 = vmatpush1.msra.mxu0 %v230
    %261 = vmatprep.subr.mxu0 0.0
    %262 = vmatpush1.msra.mxu0 %v229
    %263 = vmatprep.subr.mxu0 0.0
    %264 = vmatpush1.msra.mxu0 %v228
    %265 = vmatprep.subr.mxu0 0.0
    %266 = vmatpush1.msra.mxu0 %v227
    %267 = vmatprep.subr.mxu0 0.0
    %268 = vmatpush1.msra.mxu0 %v226
    %269 = vmatprep.subr.mxu0 0.0
    %270 = vmatpush1.msra.mxu0 %v225
    %271 = vmatprep.subr.mxu0 0.0
    %272 = vmatpush1.msra.mxu0 %v224
    %273 = vmatprep.subr.mxu0 0.0
    %274 = vmatpush1.msra.mxu0 %v223
    %275 = vmatprep.subr.mxu0 0.0
    %276 = vmatpush1.msra.mxu0 %v222
    %277 = vmatprep.subr.mxu0 0.0
    %278 = vmatpush2.msra.mxu0 0.0
    %279 = vmatprep.subr.mxu0 0.0
    %280 = vmatpush2.msra.mxu0 0.0
    %281 = vmatprep.subr.mxu0 0.0
    %282 = vmatpush2.msra.mxu0 0.0
    %283 = vmatprep.subr.mxu0 0.0
    %284 = vmatpush2.msra.mxu0 0.0
    %285 = vmatprep.subr.mxu0 0.0
    %286 = vmatpush2.msra.mxu0 0.0
    %287 = vmatprep.subr.mxu0 0.0
    %288 = vmatpush2.msra.mxu0 0.0
    %289 = vmatprep.subr.mxu0 0.0
    %290 = vmatpush2.msra.mxu0 0.0
    %291 = vmatprep.subr.mxu0 0.0
    %292 = vmatpush2.msra.mxu0 0.0
    %293 = vmatprep.subr.mxu0 0.0
    %294 = vmatpush2.msra.mxu0 0.0
    %295 = vmatprep.subr.mxu0 0.0
    %296 = vmatpush2.msra.mxu0 0.0
    %297 = vmatprep.subr.mxu0 0.0
    %298 = vmatpush2.msra.mxu0 0.0
    %299 = vmatprep.subr.mxu0 0.0
    %300 = vmatpush2.msra.mxu0 0.0
    %301 = vmatprep.subr.mxu0 0.0
    %302 = vmatpush2.msra.mxu0 0.0
    %303 = vmatprep.subr.mxu0 0.0
    %304 = vmatpush2.msra.mxu0 0.0
    %305 = vmatprep.subr.mxu0 0.0
    %306 = vmatpush2.msra.mxu0 0.0
    %307 = vmatprep.subr.mxu0 0.0
    %308 = vmatpush2.msra.mxu0 0.0
    %309 = vmatprep.mubr.f32.mxu0 0.0
    %310 = vmatmul.mubr.f32.gmra.mxu0 %v221
    %v311 = vpop.f32.mrf.mxu0
    %v312 = vadd.f32 %v243, %v311
    %v313 = vpop.f32.mrf.mxu0
    %314 = vdwg.mxu0
    %vm315 = vcmask 138240
    %316 = vst.msk [vmem:[#allocation5] sm:$0xff] %vm315, %v312
    // Predicated region
    $region34: #{tpu_custom_call.1} parent=1 // pred_check
      _
    $region35: #{tpu_custom_call.1} parent=1 // pred_check_branch
      %318 = sbr.rel (0) target = $region37
    $region36: #{tpu_custom_call.1} parent=1 // pred_region
      %s320 = ssub.s32 128, 128
      %321 = vsyncadd [#allocation4], %s320
      %s323 = sshll.u32 [#allocation5], 4
      %s324 = int_to_ptr.vmem [resolvable:$true] %s323
      %326 = dma.vmem_to_hbm [thread:$0]  %s324, 128, %s7, [#allocation4]
    $region37: #{tpu_custom_call.1} parent=1 // pred_fallthru
      _
    // Predicated region
    $region38: #{tpu_custom_call.1} parent=1 // pred_check
      _
    $region39: #{tpu_custom_call.1} parent=1 // pred_check_branch
      %328 = sbr.rel (0) target = $region41
    $region40: #{tpu_custom_call.1} parent=1 // pred_region
      %329 = dma.done [#allocation4], 128
    $region41: #{tpu_custom_call.1} parent=1 // pred_fallthru
      _
    %330 = vsyncpa [#allocation3], 1
    %331 = vsyncpa [#allocation4], 1

</llo_original>
